<compile_context>
chip_gen: v7x
topology: tpu7x:2x2x1
jax: 0.10.0
libtpu: 0.0.40
codegen_flags: <defaults>
</compile_context>

<pallas_src>
import jax
import jax.numpy as jnp
from jax import lax
from jax.experimental import pallas as pl
from jax.experimental.pallas import tpu as pltpu


def critic_kernel(x_ref, w1t_ref, b1_ref, w2_ref, b2_ref, out_ref):
    # x  : (b_tile, d_in)   native layout, contiguous HBM DMA per tile
    # w1t: (H, d_in)        resident weights (constant index_map)
    # b1 : (H, 1)           column bias, broadcast over lanes
    # w2 : (H, d_out)       original nn.Linear layout (column vector when d_out==1)
    # b2 : (d_out, 1)
    # out: (d_out, b_tile)  lane-dense output slab
    #
    # First layer: contract over d_in with batch on lanes. Equivalent to
    # w1^T @ x^T; the (b_tile, d_in) relayout lands on the XLU and is hidden
    # under the input DMA. MXU is <2% utilized but never binds (HBM-bound).
    h = lax.dot_general(
        w1t_ref[...], x_ref[...],
        dimension_numbers=(((1,), (1,)), ((), ())),
        preferred_element_type=jnp.float32)               # (H, b_tile)
    h = jnp.maximum(h + b1_ref[...], 0.0)                 # bias + ReLU on the VPU

    d_out = w2_ref.shape[1]                               # static Python branch
    if d_out == 1:
        # Second layer as VPU multiply + cross-sublane (XLU) reduction; avoids
        # an MXU pass with a single output column.
        y = jnp.sum(h * w2_ref[...], axis=0, keepdims=True)   # (1, b_tile)
    else:
        y = lax.dot_general(
            w2_ref[...], h,
            dimension_numbers=(((0,), (0,)), ((), ())),
            preferred_element_type=jnp.float32)                # (d_out, b_tile)

    out_ref[...] = (y + b2_ref[...]).astype(out_ref.dtype)


def critic_forward(x, w1, b1, w2, b2, *, b_tile=None):
    """y = relu(x @ w1 + b1) @ w2 + b2, matching torch.nn.Linear semantics with
    weights stored as (in_features, out_features)."""
    B, d_in = x.shape
    H, d_out = w2.shape

    if b_tile is None:
        # Lane-dense batch tile (multiple of 128). Large cap amortizes the
        # ~0.35 us per-grid-step overhead; for mid-size B split into >=2 tiles
        # so the "parallel" axis shards across v7x's two TensorCores.
        cap = 16 * 1024   # sweep 16k-64k on v6e/v7x; 16k stays safe on v5e VMEM
        if B <= 256:
            b_tile = max(128, ((B + 127) // 128) * 128)
        else:
            half = -(-B // 2)                      # cdiv(B, 2)
            b_tile = min(cap, ((half + 127) // 128) * 128)
    n_tiles = pl.cdiv(B, b_tile)

    # Tiny one-time layout plumbing on the resident operands only (a few KiB).
    w1t = w1.T                         # (H, d_in)
    b1c = b1.reshape(H, 1)
    b2c = b2.reshape(d_out, 1)

    out_t = pl.pallas_call(
        critic_kernel,
        out_shape=jax.ShapeDtypeStruct((d_out, B), jnp.float32),
        grid_spec=pltpu.PrefetchScalarGridSpec(
            num_scalar_prefetch=0,
            grid=(n_tiles,),
            in_specs=[
                # Activations: streamed, native (B, d_in) layout, tiled on batch.
                pl.BlockSpec((b_tile, d_in), lambda i: (i, 0)),
                # Weights / biases: constant index_map -> DMA'd once, VMEM-resident.
                pl.BlockSpec((H, d_in), lambda i: (0, 0)),
                pl.BlockSpec((H, 1), lambda i: (0, 0)),
                pl.BlockSpec((H, d_out), lambda i: (0, 0)),
                pl.BlockSpec((d_out, 1), lambda i: (0, 0)),
            ],
            out_specs=pl.BlockSpec((d_out, b_tile), lambda i: (0, i)),
        ),
        compiler_params=pltpu.CompilerParams(
            dimension_semantics=("parallel",),   # batch tiles independent (v7x dual-TC)
            vmem_limit_bytes=32 << 20,           # headroom over v5e's 16 MiB default
        ),
    )(x, w1t, b1c, w2, b2c)

    return out_t.T                     # (B, d_out)


def init_params(key, input_dim, hidden_dim, output_dim):
    # Deterministic init mimicking torch.nn.Linear defaults:
    # U(-1/sqrt(fan_in), 1/sqrt(fan_in)) for both weight and bias.
    k1, k2, k3, k4 = jax.random.split(key, 4)
    bound1 = 1.0 / jnp.sqrt(input_dim)
    bound2 = 1.0 / jnp.sqrt(hidden_dim)
    w1 = jax.random.uniform(k1, (input_dim, hidden_dim), jnp.float32, -bound1, bound1)
    b1 = jax.random.uniform(k2, (hidden_dim,), jnp.float32, -bound1, bound1)
    w2 = jax.random.uniform(k3, (hidden_dim, output_dim), jnp.float32, -bound2, bound2)
    b2 = jax.random.uniform(k4, (output_dim,), jnp.float32, -bound2, bound2)
    return w1, b1, w2, b2


def _ref(x, w1, b1, w2, b2):
    return jnp.maximum(x @ w1 + b1, 0.0) @ w2 + b2


if __name__ == "__main__":
    key = jax.random.PRNGKey(0)
    B, input_dim, hidden_dim, output_dim = 8, 16, 32, 1

    kx, kp, kx2 = jax.random.split(key, 3)
    x = jax.random.normal(kx, (B, input_dim), jnp.float32)
    w1, b1, w2, b2 = init_params(kp, input_dim, hidden_dim, output_dim)

    # Small critic call (B=8) — single (partial) 128-lane batch tile, no padding pass.
    out = critic_forward(x, w1, b1, w2, b2)
    jax.block_until_ready(out)
    ref = _ref(x, w1, b1, w2, b2)
    assert out.shape == (B, output_dim)
    assert jnp.allclose(out, ref, atol=1e-5, rtol=1e-5)

    # Exercise the multi-tile (grid > 1) + ragged-last-block (masked store) path.
    B2 = 260
    x2 = jax.random.normal(kx2, (B2, input_dim), jnp.float32)
    out2 = critic_forward(x2, w1, b1, w2, b2, b_tile=128)
    jax.block_until_ready(out2)
    ref2 = _ref(x2, w1, b1, w2, b2)
    assert out2.shape == (B2, output_dim)
    assert jnp.allclose(out2, ref2, atol=1e-5, rtol=1e-5)

    print("KERNEL_OK")
</pallas_src>

<mosaic_0001>
module attributes {stable_mosaic.version = 11 : i64} {
  func.func @critic_kernel(%arg0: i32, %arg1: memref<128x16xf32, #tpu.memory_space<vmem>>, %arg2: memref<32x16xf32, #tpu.memory_space<vmem>>, %arg3: memref<32x1xf32, #tpu.memory_space<vmem>>, %arg4: memref<32x1xf32, #tpu.memory_space<vmem>>, %arg5: memref<1x1xf32, #tpu.memory_space<vmem>>, %arg6: memref<1x128xf32, #tpu.memory_space<vmem>>) attributes {dimension_semantics = [#tpu.dimension_semantics<parallel>], iteration_bounds = array<i64: 1>, scalar_prefetch = 0 : i64, scratch_operands = 0 : i64, tpu.core_type = #tpu.core_type<tc>, window_params = [{transform_indices = @transform_0, window_bounds = array<i64: 128, 16>}, {pipeline_mode = #tpu.pipeline_mode<synchronous>, transform_indices = @transform_1, window_bounds = array<i64: 32, 16>}, {pipeline_mode = #tpu.pipeline_mode<synchronous>, transform_indices = @transform_2, window_bounds = array<i64: 32, 1>}, {pipeline_mode = #tpu.pipeline_mode<synchronous>, transform_indices = @transform_3, window_bounds = array<i64: 32, 1>}, {pipeline_mode = #tpu.pipeline_mode<synchronous>, transform_indices = @transform_4, window_bounds = array<i64: 1, 1>}, {transform_indices = @transform_5, window_bounds = array<i64: 1, 128>}]} {
    %c0 = arith.constant 0 : index
    %c0_0 = arith.constant 0 : index
    %0 = vector.load %arg2[%c0, %c0_0] : memref<32x16xf32, #tpu.memory_space<vmem>>, vector<32x16xf32>
    %c0_1 = arith.constant 0 : index
    %c0_2 = arith.constant 0 : index
    %1 = vector.load %arg1[%c0_1, %c0_2] : memref<128x16xf32, #tpu.memory_space<vmem>>, vector<128x16xf32>
    %cst = arith.constant dense<0.000000e+00> : vector<32x128xf32>
    %2 = tpu.matmul %0, %1, %cst {dimension_numbers = #tpu.dot_dimension_numbers<[1], [1], [0], [0], [0, 0, 1, 0], [], []>} : vector<32x16xf32>, vector<128x16xf32>, vector<32x128xf32> -> vector<32x128xf32>
    %c0_3 = arith.constant 0 : index
    %c0_4 = arith.constant 0 : index
    %3 = vector.load %arg3[%c0_3, %c0_4] : memref<32x1xf32, #tpu.memory_space<vmem>>, vector<32x1xf32>
    %4 = vector.broadcast %3 : vector<32x1xf32> to vector<32x128xf32>
    %5 = arith.addf %2, %4 : vector<32x128xf32>
    %cst_5 = arith.constant 0.000000e+00 : f32
    %6 = vector.broadcast %cst_5 : f32 to vector<32x128xf32>
    %7 = arith.maximumf %5, %6 : vector<32x128xf32>
    %c0_6 = arith.constant 0 : index
    %c0_7 = arith.constant 0 : index
    %8 = vector.load %arg4[%c0_6, %c0_7] : memref<32x1xf32, #tpu.memory_space<vmem>>, vector<32x1xf32>
    %9 = vector.broadcast %8 : vector<32x1xf32> to vector<32x128xf32>
    %10 = arith.mulf %7, %9 : vector<32x128xf32>
    %cst_8 = arith.constant dense<0.000000e+00> : vector<128xf32>
    %11 = vector.multi_reduction <add>, %10, %cst_8 [0] : vector<32x128xf32> to vector<128xf32>
    %12 = vector.shape_cast %11 : vector<128xf32> to vector<1x128xf32>
    %c0_9 = arith.constant 0 : index
    %c0_10 = arith.constant 0 : index
    %13 = vector.load %arg5[%c0_9, %c0_10] : memref<1x1xf32, #tpu.memory_space<vmem>>, vector<1x1xf32>
    %14 = vector.broadcast %13 : vector<1x1xf32> to vector<1x128xf32>
    %15 = arith.addf %12, %14 : vector<1x128xf32>
    %c0_11 = arith.constant 0 : index
    %c0_12 = arith.constant 0 : index
    %16 = vector.load %arg6[%c0_11, %c0_12] : memref<1x128xf32, #tpu.memory_space<vmem>>, vector<1x128xf32>
    tpu.vector_store %arg6[%c0_11, %c0_12], %15 {strides = array<i32>} : memref<1x128xf32, #tpu.memory_space<vmem>>, vector<1x128xf32>,
    return
  }
  func.func @transform_0(%arg0: i32) -> (i32, i32) {
    %c0_i32 = arith.constant 0 : i32
    %c0_i32_0 = arith.constant 0 : i32
    return %arg0, %c0_i32 : i32, i32
  }
  func.func @transform_1(%arg0: i32) -> (i32, i32) {
    %c0_i32 = arith.constant 0 : i32
    %c0_i32_0 = arith.constant 0 : i32
    %c0_i32_1 = arith.constant 0 : i32
    return %c0_i32, %c0_i32_0 : i32, i32
  }
  func.func @transform_2(%arg0: i32) -> (i32, i32) {
    %c0_i32 = arith.constant 0 : i32
    %c0_i32_0 = arith.constant 0 : i32
    %c0_i32_1 = arith.constant 0 : i32
    return %c0_i32, %c0_i32_0 : i32, i32
  }
  func.func @transform_3(%arg0: i32) -> (i32, i32) {
    %c0_i32 = arith.constant 0 : i32
    %c0_i32_0 = arith.constant 0 : i32
    %c0_i32_1 = arith.constant 0 : i32
    return %c0_i32, %c0_i32_0 : i32, i32
  }
  func.func @transform_4(%arg0: i32) -> (i32, i32) {
    %c0_i32 = arith.constant 0 : i32
    %c0_i32_0 = arith.constant 0 : i32
    %c0_i32_1 = arith.constant 0 : i32
    return %c0_i32, %c0_i32_0 : i32, i32
  }
  func.func @transform_5(%arg0: i32) -> (i32, i32) {
    %c0_i32 = arith.constant 0 : i32
    %c0_i32_0 = arith.constant 0 : i32
    return %c0_i32, %arg0 : i32, i32
  }
}

</mosaic_0001>

<llo_original>
// kernel: tpu_custom_call.1
$region0: #{tpu_custom_call.1}
  #allocation0 [shape = 'u32[]', space=smem, size = 0x4, offset = 0x4, fixed_abs, tag = 'smem constant byte address 0x4 - core index']
  #allocation1 [shape = 'u32[144,128]{1,0:T(1,128)}', space=vmem, size = 0x12000, scoped, tag = 'internal scratch']
  #allocation2 [shape = 'f32[1,1]{1,0:T(1,128)S(1)}', space=vmem, size = 0x200, scoped, tag = 'scoped memory for tpu_custom_call.1']
  %s0 = inlined_call_operand.vmem [shape: f32[8,16], index: 0, kind: input, shape index: {}]
  %s1 = inlined_call_operand.vmem [shape: f32[32,16], index: 1, kind: input, shape index: {}]
  %s2 = inlined_call_operand.vmem [shape: f32[32,1], index: 2, kind: input, shape index: {}]
  %s3 = inlined_call_operand.vmem [shape: f32[32,1], index: 3, kind: input, shape index: {}]
  %s4 = inlined_call_operand.<no memory space> [shape: f32[1,1], index: 4, kind: input, shape index: {}]
  %s5 = inlined_call_operand.hbm [shape: f32[1,8], index: 5, kind: output, shape index: {}]
  %s6 = sld [smem:[#allocation0]]
  $region30: #{tpu_custom_call.1} parent=0
    _
  %s8 = ssub.s32 1, %s6
  %s9 = scalar_select 0, %s8, %s6
  %v10 = vstv %s4
  %11 = vst [vmem:[#allocation2] sm:$0x1] %v10
  $region1: #{tpu_custom_call.1} parent=0
    #allocation3 [shape = 'u8[512]{0}', space=vmem, size = 0x400, scoped, tag = 'output window, operand 0, single buffered']
    #allocation4 [shape = 's32[1]{0}', space=sflag, size = 0x4, scoped, tag = 'scoped memory for tpu_custom_call.1']
    %12 = vsyncpa [#allocation4], 0
    // Predicated region
    $region2: #{tpu_custom_call.1} parent=1 // pred_check
      _
    $region3: #{tpu_custom_call.1} parent=1 // pred_check_branch
      %14 = sbr.rel (0) target = $region5
    $region4: #{tpu_custom_call.1} parent=1 // pred_region
      _
    $region5: #{tpu_custom_call.1} parent=1 // pred_fallthru
      _
    // Predicated region
    $region6: #{tpu_custom_call.1} parent=1 // pred_check
      _
    $region7: #{tpu_custom_call.1} parent=1 // pred_check_branch
      %16 = sbr.rel (0) target = $region9
    $region8: #{tpu_custom_call.1} parent=1 // pred_region
      _
    $region9: #{tpu_custom_call.1} parent=1 // pred_fallthru
      _
    // Predicated region
    $region10: #{tpu_custom_call.1} parent=1 // pred_check
      _
    $region11: #{tpu_custom_call.1} parent=1 // pred_check_branch
      %18 = sbr.rel (0) target = $region13
    $region12: #{tpu_custom_call.1} parent=1 // pred_region
      _
    $region13: #{tpu_custom_call.1} parent=1 // pred_fallthru
      _
    // Predicated region
    $region14: #{tpu_custom_call.1} parent=1 // pred_check
      _
    $region15: #{tpu_custom_call.1} parent=1 // pred_check_branch
      %20 = sbr.rel (0) target = $region17
    $region16: #{tpu_custom_call.1} parent=1 // pred_region
      _
    $region17: #{tpu_custom_call.1} parent=1 // pred_fallthru
      _
    // Predicated region
    $region18: #{tpu_custom_call.1} parent=1 // pred_check
      _
    $region19: #{tpu_custom_call.1} parent=1 // pred_check_branch
      %22 = sbr.rel (0) target = $region21
    $region20: #{tpu_custom_call.1} parent=1 // pred_region
      _
    $region21: #{tpu_custom_call.1} parent=1 // pred_fallthru
      _
    %v23 = vld [vmem:[%s1] sm:$0xff]
    %v24 = vld [vmem:[%s1 + $0x8] sm:$0xff]
    %v25 = vld [vmem:[%s1 + $0x10] sm:$0xff]
    %v26 = vld [vmem:[%s1 + $0x18] sm:$0xff]
    %v27 = vld [vmem:[%s0] sm:$0xff]
    %v28 = vld [vmem:[%s0 + $0x8] sm:$0xff]
    %v29 = vld [vmem:[%s0 + $0x10] sm:$0xff]
    %v30 = vld [vmem:[%s0 + $0x18] sm:$0xff]
    %v31 = vld [vmem:[%s0 + $0x20] sm:$0xff]
    %v32 = vld [vmem:[%s0 + $0x28] sm:$0xff]
    %v33 = vld [vmem:[%s0 + $0x30] sm:$0xff]
    %v34 = vld [vmem:[%s0 + $0x38] sm:$0xff]
    %v35 = vld [vmem:[%s0 + $0x40] sm:$0xff]
    %v36 = vld [vmem:[%s0 + $0x48] sm:$0xff]
    %v37 = vld [vmem:[%s0 + $0x50] sm:$0xff]
    %v38 = vld [vmem:[%s0 + $0x58] sm:$0xff]
    %v39 = vld [vmem:[%s0 + $0x60] sm:$0xff]
    %v40 = vld [vmem:[%s0 + $0x68] sm:$0xff]
    %v41 = vld [vmem:[%s0 + $0x70] sm:$0xff]
    %v42 = vld [vmem:[%s0 + $0x78] sm:$0xff]
    %v43 = vld [vmem:[%s2] sm:$0xff]
    %v44 = vld [vmem:[%s2 + $0x8] sm:$0xff]
    %v45 = vld [vmem:[%s2 + $0x10] sm:$0xff]
    %v46 = vld [vmem:[%s2 + $0x18] sm:$0xff]
    %48 = vset.pattern.permute.xlu0 0
    %49 = vperm.xlu0 %48, %v43
    %v50 = vpop.permute.xlu0 %49
    %53 = vset.pattern.permute.xlu0 0
    %54 = vperm.xlu0 %53, %v44
    %v55 = vpop.permute.xlu0 %54
    %58 = vset.pattern.permute.xlu0 0
    %59 = vperm.xlu0 %58, %v45
    %v60 = vpop.permute.xlu0 %59
    %63 = vset.pattern.permute.xlu0 0
    %64 = vperm.xlu0 %63, %v46
    %v65 = vpop.permute.xlu0 %64
    %vm67 = vcmask 130048
    %v69 = vsel %vm67, %v23, 0
    %v72 = vsel %vm67, %v24, 0
    %v75 = vsel %vm67, %v25, 0
    %v78 = vsel %vm67, %v26, 0
    %v81 = vsel %vm67, %v27, 0
    %v84 = vsel %vm67, %v28, 0
    %v87 = vsel %vm67, %v29, 0
    %v90 = vsel %vm67, %v30, 0
    %v93 = vsel %vm67, %v31, 0
    %v96 = vsel %vm67, %v32, 0
    %v99 = vsel %vm67, %v33, 0
    %v102 = vsel %vm67, %v34, 0
    %v105 = vsel %vm67, %v35, 0
    %v108 = vsel %vm67, %v36, 0
    %v111 = vsel %vm67, %v37, 0
    %v114 = vsel %vm67, %v38, 0
    %v117 = vsel %vm67, %v39, 0
    %v120 = vsel %vm67, %v40, 0
    %v123 = vsel %vm67, %v41, 0
    %v126 = vsel %vm67, %v42, 0
    %128 = vmatprep.subr.mxu0 0.0
    %129 = vmatpush1.xpose.msra.mxu0 %v81
    %130 = vmatprep.subr.mxu0 0.0
    %131 = vmatpush1.xpose.msra.mxu0 %v84
    %132 = vmatprep.subr.mxu0 0.0
    %133 = vmatpush1.xpose.msra.mxu0 %v87
    %134 = vmatprep.subr.mxu0 0.0
    %135 = vmatpush1.xpose.msra.mxu0 %v90
    %136 = vmatprep.subr.mxu0 0.0
    %137 = vmatpush1.xpose.msra.mxu0 %v93
    %138 = vmatprep.subr.mxu0 0.0
    %139 = vmatpush1.xpose.msra.mxu0 %v96
    %140 = vmatprep.subr.mxu0 0.0
    %141 = vmatpush1.xpose.msra.mxu0 %v99
    %142 = vmatprep.subr.mxu0 0.0
    %143 = vmatpush1.xpose.msra.mxu0 %v102
    %144 = vmatprep.subr.mxu0 0.0
    %145 = vmatpush1.xpose.msra.mxu0 %v105
    %146 = vmatprep.subr.mxu0 0.0
    %147 = vmatpush1.xpose.msra.mxu0 %v108
    %148 = vmatprep.subr.mxu0 0.0
    %149 = vmatpush1.xpose.msra.mxu0 %v111
    %150 = vmatprep.subr.mxu0 0.0
    %151 = vmatpush1.xpose.msra.mxu0 %v114
    %152 = vmatprep.subr.mxu0 0.0
    %153 = vmatpush1.xpose.msra.mxu0 %v117
    %154 = vmatprep.subr.mxu0 0.0
    %155 = vmatpush1.xpose.msra.mxu0 %v120
    %156 = vmatprep.subr.mxu0 0.0
    %157 = vmatpush1.xpose.msra.mxu0 %v123
    %158 = vmatprep.subr.mxu0 0.0
    %159 = vmatpush1.xpose.msra.mxu0 %v126
    %160 = vmatprep.subr.mxu0 0.0
    %161 = vmatpush1.xpose.msra.mxu0 0.0
    %162 = vmatprep.subr.mxu0 0.0
    %163 = vmatpush1.xpose.msra.mxu0 0.0
    %164 = vmatprep.subr.mxu0 0.0
    %165 = vmatpush1.xpose.msra.mxu0 0.0
    %166 = vmatprep.subr.mxu0 0.0
    %167 = vmatpush1.xpose.msra.mxu0 0.0
    %168 = vmatprep.subr.mxu0 0.0
    %169 = vmatpush1.xpose.msra.mxu0 0.0
    %170 = vmatprep.subr.mxu0 0.0
    %171 = vmatpush1.xpose.msra.mxu0 0.0
    %172 = vmatprep.subr.mxu0 0.0
    %173 = vmatpush1.xpose.msra.mxu0 0.0
    %174 = vmatprep.subr.mxu0 0.0
    %175 = vmatpush1.xpose.msra.mxu0 0.0
    %176 = vmatprep.subr.mxu0 0.0
    %177 = vmatpush1.xpose.msra.mxu0 0.0
    %178 = vmatprep.subr.mxu0 0.0
    %179 = vmatpush1.xpose.msra.mxu0 0.0
    %180 = vmatprep.subr.mxu0 0.0
    %181 = vmatpush1.xpose.msra.mxu0 0.0
    %182 = vmatprep.subr.mxu0 0.0
    %183 = vmatpush1.xpose.msra.mxu0 0.0
    %184 = vmatprep.subr.mxu0 0.0
    %185 = vmatpush1.xpose.msra.mxu0 0.0
    %186 = vmatprep.subr.mxu0 0.0
    %187 = vmatpush1.xpose.msra.mxu0 0.0
    %188 = vmatprep.subr.mxu0 0.0
    %189 = vmatpush1.xpose.msra.mxu0 0.0
    %190 = vmatprep.subr.mxu0 0.0
    %191 = vmatpush1.xpose.msra.mxu0 0.0
    %192 = vmatprep.mubr.f32.mxu0 0.0
    %193 = vmatmul.mubr.f32.gmra.mrb[0].mxu0 %v69
    %v194 = vpop.f32.mrb[0].mxu0
    %v195 = vadd.f32 %v50, %v194
    %v196 = vpop.f32.mrb[0].mxu0
    %197 = vmatprep.mubr.f32.mxu0 0.0
    %198 = vmatmul.mubr.f32.gmra.mrb[0].mxu0 %v72
    %v199 = vpop.f32.mrb[0].mxu0
    %v200 = vadd.f32 %v55, %v199
    %v201 = vpop.f32.mrb[0].mxu0
    %202 = vmatprep.mubr.f32.mxu0 0.0
    %203 = vmatmul.mubr.f32.gmra.mrb[0].mxu0 %v75
    %v204 = vpop.f32.mrb[0].mxu0
    %v205 = vadd.f32 %v60, %v204
    %v206 = vpop.f32.mrb[0].mxu0
    %207 = vmatprep.mubr.f32.mxu0 0.0
    %208 = vmatmul.mubr.f32.gmra.mrb[0].mxu0 %v78
    %v209 = vpop.f32.mrb[0].mxu0
    %v210 = vadd.f32 %v65, %v209
    %v211 = vpop.f32.mrb[0].mxu0
    %212 = vdwg.mxu0
    %v213 = vmax.f32 %v195, 0.0
    %v214 = vmax.f32 %v200, 0.0
    %v215 = vmax.f32 %v205, 0.0
    %v216 = vmax.f32 %v210, 0.0
    %v217 = vld [vmem:[%s3] sm:$0xff]
    %v218 = vld [vmem:[%s3 + $0x8] sm:$0xff]
    %v219 = vld [vmem:[%s3 + $0x10] sm:$0xff]
    %v220 = vld [vmem:[%s3 + $0x18] sm:$0xff]
    %222 = vset.pattern.permute.xlu0 0
    %223 = vperm.xlu0 %222, %v217
    %v224 = vpop.permute.xlu0 %223
    %227 = vset.pattern.permute.xlu0 0
    %228 = vperm.xlu0 %227, %v218
    %v229 = vpop.permute.xlu0 %228
    %232 = vset.pattern.permute.xlu0 0
    %233 = vperm.xlu0 %232, %v219
    %v234 = vpop.permute.xlu0 %233
    %237 = vset.pattern.permute.xlu0 0
    %238 = vperm.xlu0 %237, %v220
    %v239 = vpop.permute.xlu0 %238
    %v241 = vmul.f32 %v213, %v224
    %v242 = vmul.f32 %v214, %v229
    %v243 = vmul.f32 %v215, %v234
    %v244 = vmul.f32 %v216, %v239
    %v245 = vadd.f32 %v241, %v242
    %v246 = vadd.f32 %v245, %v243
    %v247 = vadd.f32 %v246, %v244
    %v248 = vrot.slane %v247, 4
    %v249 = vadd.f32 %v247, %v248
    %v250 = vrot.slane %v249, 2
    %v251 = vadd.f32 %v249, %v250
    %v252 = vrot.slane %v251, 1
    %v253 = vadd.f32 %v251, %v252
    %v254 = vld [vmem:[#allocation2] sm:$0x1]
    %256 = vset.pattern.permute.xlu0 0
    %257 = vperm.xlu0 %256, %v254
    %v258 = vpop.permute.xlu0 %257
    %v260 = vlaneseq
    %v261 = vshrl.u32 %v260, 7
    %v262 = vsub.s32 0, %v261
    %v263 = vrot.slane %v258, %v262
    %v264 = vadd.f32 %v253, %v263
    %265 = vst [vmem:[#allocation3] sm:$0x1] %v264
    // Predicated region
    $region22: #{tpu_custom_call.1} parent=1 // pred_check
      _
    $region23: #{tpu_custom_call.1} parent=1 // pred_check_branch
      %267 = sbr.rel (0) target = $region25
    $region24: #{tpu_custom_call.1} parent=1 // pred_region
      %s269 = ssub.s32 16, 16
      %270 = vsyncadd [#allocation4], %s269
      %s272 = sshll.u32 [#allocation3], 4
      %s273 = int_to_ptr.vmem [resolvable:$true] %s272
      %275 = dma.vmem_to_hbm [thread:$0]  %s273, 16, %s5, [#allocation4]
    $region25: #{tpu_custom_call.1} parent=1 // pred_fallthru
      _
    // Predicated region
    $region26: #{tpu_custom_call.1} parent=1 // pred_check
      _
    $region27: #{tpu_custom_call.1} parent=1 // pred_check_branch
      %277 = sbr.rel (0) target = $region29
    $region28: #{tpu_custom_call.1} parent=1 // pred_region
      %278 = dma.done [#allocation4], 16
    $region29: #{tpu_custom_call.1} parent=1 // pred_fallthru
      _
    %279 = vsyncpa [#allocation4], 1

</llo_original>
